<compile_context>
chip_gen: v6e
topology: v6e:2x2x1
jax: 0.10.0
libtpu: 0.0.40
codegen_flags: <defaults>
</compile_context>

<pallas_src>
import functools
import math

import jax
import jax.numpy as jnp
from jax.experimental import pallas as pl
from jax.experimental.pallas import tpu as pltpu

_LANE_W = 1024          # lane-dense slab width (multiple of 128 -> unmasked vst)
_MAX_BLOCK_ROWS = 1024  # (1024, 1024) f32 = 4 MiB per stream-block


def _pow_static(x, p):
    """Elementwise x ** p with a *static* python-float exponent.

    Matches torch.pow: exact (sign-preserving) repeated-multiply for integer
    exponents, real pow otherwise.
    """
    p = float(p)
    if p.is_integer():
        return x ** int(p)              # lax.integer_pow -> repeated multiply
    return jnp.power(x, jnp.float32(p))


def _quasi_poly(x, w, power_val):
    """QuasiPolySynapse.forward on a tile.

    x         : f32 tile
    w         : python list of already-loaded scalar term weights (hoisted SMEM reads)
    power_val : concrete python float
    Extra integer terms w[1]*x + ... + w[k]*x^k are evaluated in Horner form.
    """
    n_extra = min(int(math.floor(power_val) - 1), len(w))
    y = w[0] * _pow_static(x, power_val)
    if n_extra >= 2:                        # terms i = 1 .. n_extra-1
        acc = w[n_extra - 1]
        for i in range(n_extra - 2, 0, -1):
            acc = acc * x + w[i]
        y = y + acc * x
    return y


def _synapse_cost(power_val, n_terms):
    """(flops, transcendentals) per element for one QuasiPolySynapse + bias."""
    p = float(power_val)
    n_extra = min(int(math.floor(p) - 1), n_terms)
    flops = 2                               # w0 * pow(...)  and  + bias
    trans = 0
    if p.is_integer():
        flops += max(abs(int(p)).bit_length(), 1)   # integer_pow multiplies
    else:
        trans += 2                          # jnp.power -> exp(log(x) * p)
        flops += 1
    if n_extra >= 2:
        flops += 2 * (n_extra - 1) + 1      # Horner mul/add + final mul-add
    return flops, trans


def _make_network3_kernel(power_add, power_p1, power_p2, n_terms):
    def kernel(params_ref, xs_ref, o_ref):
        # Hoisted scalar reads (SMEM), once per grid step.  The params operand
        # is a tiny (3*n_terms + 3)-element SMEM array with a constant block
        # index, so it is not re-streamed per step in any meaningful way.
        w_add = [params_ref[i] for i in range(n_terms)]
        w_p1 = [params_ref[n_terms + i] for i in range(n_terms)]
        w_p2 = [params_ref[2 * n_terms + i] for i in range(n_terms)]
        bias = params_ref[3 * n_terms + 0]
        bias1 = params_ref[3 * n_terms + 1]
        bias2 = params_ref[3 * n_terms + 2]

        # Single stacked input block (2, br, W): one DMA per step.  Native
        # dtype on the wire; cast to f32 in-register.
        x0 = xs_ref[0].astype(jnp.float32)   # x[:, 0] slab
        x1 = xs_ref[1].astype(jnp.float32)   # x[:, 1] slab

        s1 = _quasi_poly(x1, w_add, power_add) + bias
        prod1 = _quasi_poly(x0, w_p1, power_p1) + bias1
        prod2 = _quasi_poly(x1, w_p2, power_p2) + bias2
        t = s1 + prod1 * prod2
        # sigmoid(t) == 0.5 * tanh(0.5 * t) + 0.5  (tanh runs on the EUP,
        # no f32 divide on the VALU, and no approximate reciprocal).
        y = jnp.tanh(t * 0.5) * 0.5 + 0.5
        o_ref[...] = y.astype(o_ref.dtype)

    return kernel


@functools.partial(jax.jit,
                   static_argnames=("power_add", "power_p1", "power_p2"))
def _forward_impl(x, w_add, w_p1, w_p2, bias, bias1, bias2, *,
                  power_add, power_p1, power_p2):
    N = x.shape[0]
    n_terms = int(w_add.shape[0])

    # Pack all scalar parameters into one small SMEM-resident f32 vector.
    params = jnp.concatenate([
        w_add.astype(jnp.float32).reshape(-1),
        w_p1.astype(jnp.float32).reshape(-1),
        w_p2.astype(jnp.float32).reshape(-1),
        jnp.stack([jnp.asarray(bias, jnp.float32).reshape(()),
                   jnp.asarray(bias1, jnp.float32).reshape(()),
                   jnp.asarray(bias2, jnp.float32).reshape(())]),
    ])

    # Lane-dense slabs for the two feature columns, stacked into ONE input
    # array (2, rows, W) so each grid step issues a single input DMA.
    W = _LANE_W
    rows = -(-N // W)
    pad = rows * W - N
    x0 = x[:, 0]
    x1 = x[:, 1]
    if pad:
        x0 = jnp.pad(x0, (0, pad))
        x1 = jnp.pad(x1, (0, pad))
    xs = jnp.stack([x0, x1]).reshape(2, rows, W)

    # Block rows: full extent for small inputs, else 1024 (4 MiB f32 per
    # stream-block, ~12 MiB of traffic per step); cdiv grid handles a ragged
    # last block.
    br = rows if rows <= _MAX_BLOCK_ROWS else _MAX_BLOCK_ROWS
    grid = (pl.cdiv(rows, br),)

    itemsize = jnp.dtype(x.dtype).itemsize
    n_elems = rows * W

    # Honest cost estimate: non-integer powers lower to exp(log(x)*p).
    f_a, t_a = _synapse_cost(power_add, n_terms)
    f_1, t_1 = _synapse_cost(power_p1, n_terms)
    f_2, t_2 = _synapse_cost(power_p2, n_terms)
    flops_per = f_a + f_1 + f_2 + 5          # + prod1*prod2, sum, sigmoid arith
    trans_per = t_a + t_1 + t_2 + 1          # + tanh
    cost = pl.CostEstimate(
        flops=flops_per * n_elems,
        transcendentals=trans_per * n_elems,
        bytes_accessed=3 * n_elems * itemsize,   # 2 reads + 1 write
    )

    # Explicit scoped-VMEM budget: double-buffered (input block + output block)
    # + 4 MiB headroom, capped at 32 MiB so it is safe on v5e (128 MiB phys,
    # 16 MiB default scope), v6e (128 MiB), and v7x (64 MiB phys per TC).
    bytes_per_step = 3 * br * W * itemsize   # (2 input slabs + 1 output) per step
    vmem_limit = int(min(max(2 * bytes_per_step + (4 << 20), 16 << 20), 32 << 20))

    kernel = _make_network3_kernel(power_add, power_p1, power_p2, n_terms)

    out2 = pl.pallas_call(
        kernel,
        out_shape=jax.ShapeDtypeStruct((rows, W), x.dtype),
        grid_spec=pl.GridSpec(
            grid=grid,
            in_specs=[
                pl.BlockSpec(memory_space=pltpu.MemorySpace.SMEM),     # packed scalars
                pl.BlockSpec((2, br, W), lambda i: (0, i, 0)),          # stacked x0/x1
            ],
            out_specs=pl.BlockSpec((br, W), lambda i: (i, 0)),
        ),
        compiler_params=pltpu.CompilerParams(
            # TODO(synk): verify on v7x that "parallel" actually shards this
            # axis across both TensorCores (per-TC occupancy in xprof); if not,
            # switch to pltpu.CORE_PARALLEL.
            dimension_semantics=("parallel",),
            vmem_limit_bytes=vmem_limit,
        ),
        cost_estimate=cost,
    )(params, xs)

    # Skip the N-element copy entirely when no padding was needed: the
    # reshape below is metadata-only in that case.
    out_flat = out2.reshape(-1)
    if pad:
        out_flat = out_flat[:N]
    return out_flat.reshape(N, 1)


def network3_forward(x, *, power_add, power_p1, power_p2,
                     w_add, w_p1, w_p2, bias, bias1, bias2):
    """Pallas implementation of Network3.forward.

    x : (N, F>=2) float array; columns 0 and 1 are used.
    power_* must be concrete scalars (the PyTorch module calls .item()).
    Returns (N, 1) with dtype == x.dtype.
    """
    assert x.ndim == 2 and x.shape[1] >= 2, "x must be (N, F) with F >= 2"

    def _concrete(p, name):
        try:
            return float(p)
        except TypeError as e:  # includes ConcretizationTypeError under jit
            raise TypeError(
                f"{name} must be concrete at call time (the PyTorch module "
                f"uses .item()); got a traced value") from e

    return _forward_impl(
        x, w_add, w_p1, w_p2, bias, bias1, bias2,
        power_add=_concrete(power_add, "power_add"),
        power_p1=_concrete(power_p1, "power_p1"),
        power_p2=_concrete(power_p2, "power_p2"),
    )


def _reference_network3(x, power_add, power_p1, power_p2,
                        w_add, w_p1, w_p2, bias, bias1, bias2):
    """Pure-JAX reference mirroring the PyTorch forward exactly."""
    xf = x.astype(jnp.float32)
    x0, x1 = xf[:, 0], xf[:, 1]

    def syn(v, w, p):
        p = float(p)
        y = w[0] * _pow_static(v, p)
        for i in range(1, min(int(math.floor(p) - 1), int(w.shape[0]))):
            y = y + w[i] * _pow_static(v, float(i))
        return y

    s1 = syn(x1, w_add, power_add) + jnp.asarray(bias, jnp.float32).reshape(())
    prod1 = syn(x0, w_p1, power_p1) + jnp.asarray(bias1, jnp.float32).reshape(())
    prod2 = syn(x1, w_p2, power_p2) + jnp.asarray(bias2, jnp.float32).reshape(())
    t = s1 + prod1 * prod2
    y = 1.0 / (1.0 + jnp.exp(-t))
    return y[:, None].astype(x.dtype)


if __name__ == "__main__":
    key = jax.random.PRNGKey(0)
    k_x, k_x2, k_wa, k_w1, k_w2, k_b, k_b1, k_b2 = jax.random.split(key, 8)

    # Parameters (shapes from Network3.__init__): three QuasiPolySynapse
    # modules, each with power (initial value 1.0) and term_weights ~ randn(3),
    # plus three scalar biases ~ randn(1).
    power_add = 1.0
    power_p1 = 1.0
    power_p2 = 1.0
    w_add = jax.random.normal(k_wa, (3,), dtype=jnp.float32)
    w_p1 = jax.random.normal(k_w1, (3,), dtype=jnp.float32)
    w_p2 = jax.random.normal(k_w2, (3,), dtype=jnp.float32)
    bias = jax.random.normal(k_b, (1,), dtype=jnp.float32)
    bias1 = jax.random.normal(k_b1, (1,), dtype=jnp.float32)
    bias2 = jax.random.normal(k_b2, (1,), dtype=jnp.float32)

    # Network3 consumes x[:, 0] and x[:, 1] -> 2-feature input.
    batch = 2048
    x = jax.random.normal(k_x, (batch, 2), dtype=jnp.float32)

    # Default case: all powers = 1  ->  each synapse is just w0 * v.
    out = network3_forward(x,
                           power_add=power_add, power_p1=power_p1, power_p2=power_p2,
                           w_add=w_add, w_p1=w_p1, w_p2=w_p2,
                           bias=bias, bias1=bias1, bias2=bias2)
    out = jax.block_until_ready(out)
    ref = _reference_network3(x, power_add, power_p1, power_p2,
                              w_add, w_p1, w_p2, bias, bias1, bias2)
    assert out.shape == (batch, 1) and out.dtype == x.dtype
    assert jnp.allclose(out, ref, rtol=1e-5, atol=1e-5)

    # Extra check: powers that activate the polynomial terms (floor(4)-1 = 3
    # -> adds w1*v + w2*v^2 via the in-kernel Horner path).  Positive inputs
    # keep magnitudes bounded so the comparison stays tight in float32.
    xp = jax.random.uniform(k_x2, (batch, 2), dtype=jnp.float32,
                            minval=0.1, maxval=1.0)
    out4 = jax.block_until_ready(network3_forward(
        xp, power_add=4.0, power_p1=3.0, power_p2=2.0,
        w_add=w_add, w_p1=w_p1, w_p2=w_p2, bias=bias, bias1=bias1, bias2=bias2))
    ref4 = _reference_network3(xp, 4.0, 3.0, 2.0,
                               w_add, w_p1, w_p2, bias, bias1, bias2)
    assert jnp.allclose(out4, ref4, rtol=1e-4, atol=1e-4)

    # Ragged-tail case (N not a multiple of the 1024-lane slab width).
    xr = jax.random.normal(k_x2, (1537, 2), dtype=jnp.float32)
    outr = jax.block_until_ready(network3_forward(
        xr, power_add=1.0, power_p1=1.0, power_p2=1.0,
        w_add=w_add, w_p1=w_p1, w_p2=w_p2, bias=bias, bias1=bias1, bias2=bias2))
    refr = _reference_network3(xr, 1.0, 1.0, 1.0,
                               w_add, w_p1, w_p2, bias, bias1, bias2)
    assert outr.shape == (1537, 1)
    assert jnp.allclose(outr, refr, rtol=1e-5, atol=1e-5)

    print("KERNEL_OK")
</pallas_src>

<mosaic_0001>
module attributes {stable_mosaic.version = 11 : i64} {
  func.func @kernel(%arg0: i32, %arg1: memref<12xf32, #tpu.memory_space<smem>>, %arg2: memref<2x2x1024xf32, #tpu.memory_space<vmem>>, %arg3: memref<2x1024xf32, #tpu.memory_space<vmem>>) attributes {dimension_semantics = [#tpu.dimension_semantics<parallel>], iteration_bounds = array<i64: 1>, scalar_prefetch = 0 : i64, scratch_operands = 0 : i64, tpu.core_type = #tpu.core_type<tc>, window_params = [{transform_indices = @transform_0, window_bounds = array<i64: 12>}, {transform_indices = @transform_1, window_bounds = array<i64: 2, 2, 1024>}, {transform_indices = @transform_2, window_bounds = array<i64: 2, 1024>}]} {
    %c0 = arith.constant 0 : index
    %0 = memref.load %arg1[%c0] : memref<12xf32, #tpu.memory_space<smem>>
    %c3 = arith.constant 3 : index
    %1 = memref.load %arg1[%c3] : memref<12xf32, #tpu.memory_space<smem>>
    %c6 = arith.constant 6 : index
    %2 = memref.load %arg1[%c6] : memref<12xf32, #tpu.memory_space<smem>>
    %c9 = arith.constant 9 : index
    %3 = memref.load %arg1[%c9] : memref<12xf32, #tpu.memory_space<smem>>
    %c10 = arith.constant 10 : index
    %4 = memref.load %arg1[%c10] : memref<12xf32, #tpu.memory_space<smem>>
    %c11 = arith.constant 11 : index
    %5 = memref.load %arg1[%c11] : memref<12xf32, #tpu.memory_space<smem>>
    %c0_0 = arith.constant 0 : index
    %c0_1 = arith.constant 0 : index
    %c0_2 = arith.constant 0 : index
    %6 = vector.load %arg2[%c0_0, %c0_1, %c0_2] : memref<2x2x1024xf32, #tpu.memory_space<vmem>>, vector<1x2x1024xf32>
    %7 = vector.shape_cast %6 : vector<1x2x1024xf32> to vector<2x1024xf32>
    %c1 = arith.constant 1 : index
    %c0_3 = arith.constant 0 : index
    %c0_4 = arith.constant 0 : index
    %8 = vector.load %arg2[%c1, %c0_3, %c0_4] : memref<2x2x1024xf32, #tpu.memory_space<vmem>>, vector<1x2x1024xf32>
    %9 = vector.shape_cast %8 : vector<1x2x1024xf32> to vector<2x1024xf32>
    %10 = vector.broadcast %0 : f32 to vector<2x1024xf32>
    %11 = arith.mulf %10, %9 : vector<2x1024xf32>
    %12 = vector.broadcast %3 : f32 to vector<2x1024xf32>
    %13 = arith.addf %11, %12 : vector<2x1024xf32>
    %14 = vector.broadcast %1 : f32 to vector<2x1024xf32>
    %15 = arith.mulf %14, %7 : vector<2x1024xf32>
    %16 = vector.broadcast %4 : f32 to vector<2x1024xf32>
    %17 = arith.addf %15, %16 : vector<2x1024xf32>
    %18 = vector.broadcast %2 : f32 to vector<2x1024xf32>
    %19 = arith.mulf %18, %9 : vector<2x1024xf32>
    %20 = vector.broadcast %5 : f32 to vector<2x1024xf32>
    %21 = arith.addf %19, %20 : vector<2x1024xf32>
    %22 = arith.mulf %17, %21 : vector<2x1024xf32>
    %23 = arith.addf %13, %22 : vector<2x1024xf32>
    %cst = arith.constant 5.000000e-01 : f32
    %24 = vector.broadcast %cst : f32 to vector<2x1024xf32>
    %25 = arith.mulf %23, %24 : vector<2x1024xf32>
    %26 = math.tanh %25 : vector<2x1024xf32>
    %cst_5 = arith.constant 5.000000e-01 : f32
    %27 = vector.broadcast %cst_5 : f32 to vector<2x1024xf32>
    %28 = arith.mulf %26, %27 : vector<2x1024xf32>
    %cst_6 = arith.constant 5.000000e-01 : f32
    %29 = vector.broadcast %cst_6 : f32 to vector<2x1024xf32>
    %30 = arith.addf %28, %29 : vector<2x1024xf32>
    %c0_7 = arith.constant 0 : index
    %c0_8 = arith.constant 0 : index
    %31 = vector.load %arg3[%c0_7, %c0_8] : memref<2x1024xf32, #tpu.memory_space<vmem>>, vector<2x1024xf32>
    tpu.vector_store %arg3[%c0_7, %c0_8], %30 {strides = array<i32>} : memref<2x1024xf32, #tpu.memory_space<vmem>>, vector<2x1024xf32>,
    return
  }
  func.func @transform_0(%arg0: i32) -> i32 {
    %c0_i32 = arith.constant 0 : i32
    %c0_i32_0 = arith.constant 0 : i32
    return %c0_i32 : i32
  }
  func.func @transform_1(%arg0: i32) -> (i32, i32, i32) {
    %c0_i32 = arith.constant 0 : i32
    %c0_i32_0 = arith.constant 0 : i32
    %c0_i32_1 = arith.constant 0 : i32
    return %c0_i32, %arg0, %c0_i32_0 : i32, i32, i32
  }
  func.func @transform_2(%arg0: i32) -> (i32, i32) {
    %c0_i32 = arith.constant 0 : i32
    %c0_i32_0 = arith.constant 0 : i32
    return %arg0, %c0_i32 : i32, i32
  }
}

</mosaic_0001>

<llo_original>
// kernel: _forward_impl.1
$region0: #{_forward_impl.1}
  #allocation0 [shape = 'u32[]', space=smem, size = 0x4, offset = 0x4, fixed_abs, tag = 'smem constant byte address 0x4 - core index']
  #allocation1 [shape = 'u32[144,128]{1,0:T(1,128)}', space=vmem, size = 0x12000, scoped, tag = 'internal scratch']
  %s0 = inlined_call_operand.vmem [shape: f32[12], index: 0, kind: input, shape index: {}]
  %s1 = inlined_call_operand.vmem [shape: f32[2,2,1024], index: 1, kind: input, shape index: {}]
  %s2 = inlined_call_operand.vmem [shape: f32[2,1024], index: 2, kind: output, shape index: {}]
  %s3 = sld [smem:[#allocation0]]
  $region22: #{_forward_impl.1} parent=0
    _
  %s5 = ssub.s32 1, %s3
  %s6 = scalar_select 0, %s5, %s3
  $region1: #{_forward_impl.1} parent=0
    #allocation2 [shape = 'u8[512]{0}', space=smem, size = 0x200, scoped, tag = 'input window, operand 0, single buffered']
    #allocation3 [shape = 's32[1]{0}', space=sflag, size = 0x4, scoped, tag = 'scoped memory for _forward_impl.1']
    %7 = vsyncpa [#allocation3], 0
    // Predicated region
    $region2: #{_forward_impl.1} parent=1 // pred_check
      _
    $region3: #{_forward_impl.1} parent=1 // pred_check_branch
      %9 = sbr.rel (0) target = $region5
    $region4: #{_forward_impl.1} parent=1 // pred_region
      %s11 = ssub.s32 16, 16
      %12 = vsyncadd [#allocation3], %s11
      %s14 = sshll.u32 %s0, 4
      %s15 = int_to_ptr.vmem [resolvable:$true] %s14
      %17 = dma.vmem_to_smem %s15, 16, [#allocation2], [#allocation3]
    $region5: #{_forward_impl.1} parent=1 // pred_fallthru
      _
    // Predicated region
    $region6: #{_forward_impl.1} parent=1 // pred_check
      _
    $region7: #{_forward_impl.1} parent=1 // pred_check_branch
      %19 = sbr.rel (0) target = $region9
    $region8: #{_forward_impl.1} parent=1 // pred_region
      _
    $region9: #{_forward_impl.1} parent=1 // pred_fallthru
      _
    // Predicated region
    $region10: #{_forward_impl.1} parent=1 // pred_check
      _
    $region11: #{_forward_impl.1} parent=1 // pred_check_branch
      %21 = sbr.rel (0) target = $region13
    $region12: #{_forward_impl.1} parent=1 // pred_region
      %22 = dma.done [#allocation3], 16
    $region13: #{_forward_impl.1} parent=1 // pred_fallthru
      _
    %23 = sfence
    %s24 = sld [smem:[#allocation2]]
    %s25 = sld [smem:[#allocation2 + $0x3]]
    %s26 = sld [smem:[#allocation2 + $0x6]]
    %s27 = sld [smem:[#allocation2 + $0x9]]
    %s28 = sld [smem:[#allocation2 + $0xa]]
    %s29 = sld [smem:[#allocation2 + $0xb]]
    %v30 = vld [vmem:[%s1] sm:$0xff]
    %v31 = vld [vmem:[%s1 + $0x8] sm:$0xff]
    %s32 = scalar_lea.vmem %s1, 16
    %v33 = vld [vmem:[%s32] sm:$0xff]
    %v34 = vld [vmem:[%s32 + $0x8] sm:$0xff]
    %v35 = vstv %s24
    %v36 = vmul.f32 %v35, %v33
    %v37 = vmul.f32 %v35, %v34
    %v38 = vstv %s27
    %v39 = vadd.f32 %v36, %v38
    %v40 = vadd.f32 %v37, %v38
    %v41 = vstv %s25
    %v42 = vmul.f32 %v41, %v30
    %v43 = vmul.f32 %v41, %v31
    %v44 = vstv %s28
    %v45 = vadd.f32 %v42, %v44
    %v46 = vadd.f32 %v43, %v44
    %v47 = vstv %s26
    %v48 = vmul.f32 %v47, %v33
    %v49 = vmul.f32 %v47, %v34
    %v50 = vstv %s29
    %v51 = vadd.f32 %v48, %v50
    %v52 = vadd.f32 %v49, %v50
    %v53 = vmul.f32 %v45, %v51
    %v54 = vmul.f32 %v46, %v52
    %v55 = vadd.f32 %v39, %v53
    %v56 = vadd.f32 %v40, %v54
    %v57 = vmul.f32 %v55, 0.5
    %v58 = vmul.f32 %v56, 0.5
    %v59 = vtanh.pop %v57
    %v60 = vtanh.pop %v58
    %v61 = vmul.f32 %v59, 0.5
    %v62 = vmul.f32 %v60, 0.5
    %v63 = vadd.f32 %v61, 0.5
    %v64 = vadd.f32 %v62, 0.5
    %65 = vst [vmem:[%s2] sm:$0xff] %v63
    %66 = vst [vmem:[%s2 + $0x8] sm:$0xff] %v64
    // Predicated region
    $region14: #{_forward_impl.1} parent=1 // pred_check
      _
    $region15: #{_forward_impl.1} parent=1 // pred_check_branch
      %68 = sbr.rel (0) target = $region17
    $region16: #{_forward_impl.1} parent=1 // pred_region
      _
    $region17: #{_forward_impl.1} parent=1 // pred_fallthru
      _
    // Predicated region
    $region18: #{_forward_impl.1} parent=1 // pred_check
      _
    $region19: #{_forward_impl.1} parent=1 // pred_check_branch
      %70 = sbr.rel (0) target = $region21
    $region20: #{_forward_impl.1} parent=1 // pred_region
      _
    $region21: #{_forward_impl.1} parent=1 // pred_fallthru
      _
    %71 = vsyncpa [#allocation3], 1

</llo_original>
